<compile_context>
chip_gen: v7x
topology: tpu7x:2x2x1
jax: 0.10.0
libtpu: 0.0.40
codegen_flags: <defaults>
</compile_context>

<pallas_src>
import jax
import jax.numpy as jnp
from jax.experimental import pallas as pl
from jax.experimental.pallas import tpu as pltpu


def _copy_kernel(x_ref, o_ref):
    # Pure tile copy: the chomp lives in the grid/BlockSpecs, so there is no
    # in-kernel lane slice (which could cross (8,128) tile boundaries).
    o_ref[...] = x_ref[...]


def _round_up(x: int, m: int) -> int:
    return ((x + m - 1) // m) * m


def chomp1d(x: jax.Array, chomp_size: int) -> jax.Array:
    """Pallas equivalent of TCN Chomp1d: x[:, :, :-chomp_size] (contiguous)."""
    B, C, L = x.shape
    assert 0 <= chomp_size < L, "chomp_size must be in [0, L)"
    if chomp_size == 0:
        # PyTorch's Chomp1d with chomp_size == 0 keeps x unchanged.
        return x
    L_out = L - chomp_size

    # Collapse batch and channel into one sublane-dense row axis.
    R = B * C
    x2 = x.reshape(R, L)

    # Tile selection: sublane tile a multiple of the packed-row count
    # (8 for f32, 16 for bf16, 32 for int8), lane tile a multiple of 128.
    # 256 x 512 f32 tiles = 512 KiB each -> 4 live double-buffered tiles = 2 MiB,
    # safe on v5e/v6e/v7x default scoped VMEM; clamped (rounded up to the HW
    # tile) for small inputs — Pallas masks the partial edge blocks.
    itemsize = jnp.dtype(x.dtype).itemsize
    sub_pack = max(1, 4 // itemsize) * 8
    TR = min(_round_up(R, sub_pack), 256)
    TC = min(_round_up(L_out, 128), 512)

    grid = (pl.cdiv(R, TR), pl.cdiv(L_out, TC))

    # Same block index for input and output: the grid only covers the first
    # L_out columns of the input, so the dropped tail is (except for the edge
    # tile's masked overrun) never read from HBM.
    in_spec = pl.BlockSpec((TR, TC), lambda i, j: (i, j))
    out_spec = pl.BlockSpec((TR, TC), lambda i, j: (i, j))

    bytes_accessed = R * L_out * itemsize * 2  # read + write of the kept slice

    out2 = pl.pallas_call(
        _copy_kernel,
        out_shape=jax.ShapeDtypeStruct((R, L_out), x.dtype),
        grid=grid,
        in_specs=[in_spec],
        out_specs=out_spec,
        compiler_params=pltpu.CompilerParams(
            dimension_semantics=("parallel", "parallel"),
        ),
        cost_estimate=pl.CostEstimate(
            flops=0, transcendentals=0, bytes_accessed=bytes_accessed
        ),
    )(x2)
    return out2.reshape(B, C, L_out)


if __name__ == "__main__":
    key = jax.random.PRNGKey(0)

    # Small shape consistent with the module's (N, C, L) forward.
    B, C, L = 2, 4, 16
    chomp_size = 3
    x = jax.random.normal(key, (B, C, L), dtype=jnp.float32)

    out = jax.block_until_ready(chomp1d(x, chomp_size))
    ref = x[:, :, :-chomp_size]
    assert out.shape == (B, C, L - chomp_size), out.shape
    assert jnp.array_equal(out, ref), "mismatch vs reference slice (small case)"

    # Second check exercising multiple lane tiles + a partial (masked) edge
    # tile, to verify tail-block handling against the pure-JAX reference.
    key2 = jax.random.PRNGKey(0)
    B2, C2, L2, chomp2 = 4, 10, 1200, 7
    x2 = jax.random.normal(key2, (B2, C2, L2), dtype=jnp.float32)
    out2 = jax.block_until_ready(chomp1d(x2, chomp2))
    ref2 = x2[:, :, :-chomp2]
    assert out2.shape == (B2, C2, L2 - chomp2), out2.shape
    assert jnp.array_equal(out2, ref2), "mismatch vs reference slice (tiled case)"

    # chomp_size == 0 no-op path (PyTorch-compatible).
    out0 = jax.block_until_ready(chomp1d(x, 0))
    assert jnp.array_equal(out0, x)

    print("KERNEL_OK")
</pallas_src>

<mosaic_0001>
module attributes {stable_mosaic.version = 11 : i64} {
  func.func @_copy_kernel(%arg0: i32, %arg1: i32, %arg2: memref<8x128xf32, #tpu.memory_space<vmem>>, %arg3: memref<8x128xf32, #tpu.memory_space<vmem>>) attributes {dimension_semantics = [#tpu.dimension_semantics<parallel>, #tpu.dimension_semantics<parallel>], iteration_bounds = array<i64: 1, 1>, scalar_prefetch = 0 : i64, scratch_operands = 0 : i64, tpu.core_type = #tpu.core_type<tc>, window_params = [{transform_indices = @transform_0, window_bounds = array<i64: 8, 128>}, {transform_indices = @transform_1, window_bounds = array<i64: 8, 128>}]} {
    %c0 = arith.constant 0 : index
    %c0_0 = arith.constant 0 : index
    %0 = vector.load %arg2[%c0, %c0_0] : memref<8x128xf32, #tpu.memory_space<vmem>>, vector<8x128xf32>
    %c0_1 = arith.constant 0 : index
    %c0_2 = arith.constant 0 : index
    %1 = vector.load %arg3[%c0_1, %c0_2] : memref<8x128xf32, #tpu.memory_space<vmem>>, vector<8x128xf32>
    tpu.vector_store %arg3[%c0_1, %c0_2], %0 {strides = array<i32>} : memref<8x128xf32, #tpu.memory_space<vmem>>, vector<8x128xf32>,
    return
  }
  func.func @transform_0(%arg0: i32, %arg1: i32) -> (i32, i32) {
    %c0_i32 = arith.constant 0 : i32
    return %arg0, %arg1 : i32, i32
  }
  func.func @transform_1(%arg0: i32, %arg1: i32) -> (i32, i32) {
    %c0_i32 = arith.constant 0 : i32
    return %arg0, %arg1 : i32, i32
  }
}

</mosaic_0001>

<llo_original>
// kernel: tpu_custom_call.1
$region0: #{tpu_custom_call.1}
  #allocation0 [shape = 'u32[]', space=smem, size = 0x4, offset = 0x4, fixed_abs, tag = 'smem constant byte address 0x4 - core index']
  #allocation1 [shape = 'u32[144,128]{1,0:T(1,128)}', space=vmem, size = 0x12000, scoped, tag = 'internal scratch']
  %s0 = inlined_call_operand.hbm [shape: f32[8,16], index: 0, kind: input, shape index: {}]
  %s1 = inlined_call_operand.hbm [shape: f32[8,13], index: 1, kind: output, shape index: {}]
  %s2 = sld [smem:[#allocation0]]
  $region18: #{tpu_custom_call.1} parent=0
    _
  %s4 = ssub.s32 1, %s2
  %s5 = scalar_select 0, %s4, %s2
  $region1: #{tpu_custom_call.1} parent=0
    #allocation2 [shape = 'u8[4096]{0}', space=vmem, size = 0x1000, scoped, tag = 'input window, operand 0, single buffered']
    #allocation3 [shape = 's32[1]{0}', space=sflag, size = 0x4, scoped, tag = 'scoped memory for tpu_custom_call.1']
    #allocation4 [shape = 's32[1]{0}', space=sflag, size = 0x4, scoped, tag = 'scoped memory for tpu_custom_call.1']
    #allocation5 [shape = 'u8[4096]{0}', space=vmem, size = 0x1000, scoped, tag = 'output window, operand 0, single buffered']
    %6 = vsyncpa [#allocation3], 0
    %7 = vsyncpa [#allocation4], 0
    // Predicated region
    $region2: #{tpu_custom_call.1} parent=1 // pred_check
      _
    $region3: #{tpu_custom_call.1} parent=1 // pred_check_branch
      %9 = sbr.rel (0) target = $region5
    $region4: #{tpu_custom_call.1} parent=1 // pred_region
      %s11 = ssub.s32 128, 128
      %12 = vsyncadd [#allocation3], %s11
      %s14 = sshll.u32 [#allocation2], 4
      %s15 = int_to_ptr.vmem [resolvable:$true] %s14
      %17 = dma.hbm_to_vmem [thread:$0]  %s0, 128, %s15, [#allocation3]
    $region5: #{tpu_custom_call.1} parent=1 // pred_fallthru
      _
    // Predicated region
    $region6: #{tpu_custom_call.1} parent=1 // pred_check
      _
    $region7: #{tpu_custom_call.1} parent=1 // pred_check_branch
      %19 = sbr.rel (0) target = $region9
    $region8: #{tpu_custom_call.1} parent=1 // pred_region
      %20 = dma.done [#allocation3], 128
    $region9: #{tpu_custom_call.1} parent=1 // pred_fallthru
      _
    %v21 = vld [vmem:[#allocation2] sm:$0xff]
    %22 = vst [vmem:[#allocation5] sm:$0xff] %v21
    // Predicated region
    $region10: #{tpu_custom_call.1} parent=1 // pred_check
      _
    $region11: #{tpu_custom_call.1} parent=1 // pred_check_branch
      %24 = sbr.rel (0) target = $region13
    $region12: #{tpu_custom_call.1} parent=1 // pred_region
      %s26 = ssub.s32 128, 128
      %27 = vsyncadd [#allocation4], %s26
      %s29 = sshll.u32 [#allocation5], 4
      %s30 = int_to_ptr.vmem [resolvable:$true] %s29
      %32 = dma.vmem_to_hbm [thread:$0]  %s30, 128, %s1, [#allocation4]
    $region13: #{tpu_custom_call.1} parent=1 // pred_fallthru
      _
    // Predicated region
    $region14: #{tpu_custom_call.1} parent=1 // pred_check
      _
    $region15: #{tpu_custom_call.1} parent=1 // pred_check_branch
      %34 = sbr.rel (0) target = $region17
    $region16: #{tpu_custom_call.1} parent=1 // pred_region
      %35 = dma.done [#allocation4], 128
    $region17: #{tpu_custom_call.1} parent=1 // pred_fallthru
      _
    %36 = vsyncpa [#allocation3], 1
    %37 = vsyncpa [#allocation4], 1

</llo_original>
